<compile_context>
chip_gen: v7x
topology: tpu7x:2x2x1
jax: 0.10.0
libtpu: 0.0.40
codegen_flags: <defaults>
</compile_context>

<pallas_src>
import functools

import jax
import jax.numpy as jnp
import numpy as np
from jax import lax
from jax.experimental import pallas as pl
from jax.experimental.pallas import tpu as pltpu

_THRESH = 0.0
_LANES = 128
_SUBLANES = 8
_MAX_BLOCK_ROWS = 2048   # 2048 x 128 f32 = 1 MiB per input block
_NUM_SPLIT = 2           # leading "parallel" axis for v7x megacore


def _bce_sum_kernel(*refs, n, blk_rows, n_inner, has_mask, rebalance,
                    needs_tail):
    """Elementwise BCE-with-logits, optional rebalance weight, masked sum."""
    idx = 0
    if rebalance:
        w_ref = refs[idx]; idx += 1            # SMEM: [wpos, wneg]
    pred_ref = refs[idx]; idx += 1
    targ_ref = refs[idx]; idx += 1
    if has_mask:
        mask_ref = refs[idx]; idx += 1
    out_ref = refs[idx]; idx += 1
    acc_ref = refs[idx]; idx += 1

    c = pl.program_id(0)   # core-split axis
    i = pl.program_id(1)   # reduction axis

    @pl.when(i == 0)
    def _init():
        acc_ref[...] = jnp.zeros_like(acc_ref)

    x = pred_ref[...].astype(jnp.float32)
    y = targ_ref[...].astype(jnp.float32)

    # Numerically stable BCE-with-logits (matches torch.nn.BCEWithLogitsLoss):
    # max(x,0) - x*y + log(1 + exp(-|x|))
    contrib = jnp.maximum(x, 0.0) - x * y + jnp.log1p(jnp.exp(-jnp.abs(x)))

    if rebalance:
        wpos = w_ref[0]
        wneg = w_ref[1]
        contrib = contrib * jnp.where(y > _THRESH, wpos, wneg)

    if has_mask:
        m = mask_ref[...].astype(jnp.float32)
        if rebalance:
            # gunpowder_balance zeroes the weight outside the binary mask.
            contrib = contrib * (m > 0.0).astype(jnp.float32)
        contrib = contrib * m

    if needs_tail:
        # Mask elements past the logical length n (padding / partial blocks /
        # clamped out-of-range blocks all land here). jnp.where also discards
        # any NaN/Inf produced from garbage in out-of-bounds regions.
        blk = c * n_inner + i
        row_id = lax.broadcasted_iota(jnp.int32, contrib.shape, 0)
        lane_id = lax.broadcasted_iota(jnp.int32, contrib.shape, 1)
        flat = (blk * blk_rows + row_id) * _LANES + lane_id
        contrib = jnp.where(flat < n, contrib, 0.0)

    acc_ref[...] += contrib

    @pl.when(i == n_inner - 1)
    def _finalize():
        out_ref[...] = jnp.sum(acc_ref[...]).reshape(1, 1, 1)


def binomial_cross_entropy_with_logits(pred, target, mask=None, rebalance=False):
    """Forward pass of BinomialCrossEntropyWithLogits. Returns scalar cost."""
    n = int(np.prod(pred.shape))
    has_mask = mask is not None

    # Flatten to a lane-major (rows, 128) slab. Pad only when n is not already
    # a multiple of one (8, 128) tile; the aligned path does no copy.
    tile = _SUBLANES * _LANES
    n_pad = ((n + tile - 1) // tile) * tile

    def _flat(a):
        a = a.reshape(-1)
        if n_pad != n:
            a = jnp.pad(a, (0, n_pad - n))
        return a.reshape(-1, _LANES)

    pred_f = _flat(pred)
    targ_f = _flat(target)
    mask_f = _flat(mask) if has_mask else None

    rows = n_pad // _LANES                      # multiple of 8
    blk_rows = min(_MAX_BLOCK_ROWS, rows)       # multiple of 8
    n_blocks = (rows + blk_rows - 1) // blk_rows
    num_split = _NUM_SPLIT if n_blocks >= _NUM_SPLIT else 1
    n_inner = (n_blocks + num_split - 1) // num_split
    covered = num_split * n_inner * blk_rows * _LANES
    needs_tail = covered != n

    inputs = []
    in_specs = []

    if rebalance:
        # gunpowder_balance scalar statistics in plain JAX (scalar setup);
        # the per-element weight is applied inside the kernel.
        # TODO(synk): torch's gunpowder_balance returns None (and the module
        # would crash) when target is all-zero; that degenerate path (and the
        # `assert nmsk > 0` check) is not reproduced.
        tgt32 = target.astype(jnp.float32)
        pos = (tgt32 > _THRESH).astype(jnp.float32)
        if has_mask:
            bmsk = (mask.astype(jnp.float32) > 0.0).astype(jnp.float32)
            nmsk = jnp.sum(bmsk)
            npos = jnp.sum(pos * bmsk)
        else:
            nmsk = jnp.float32(n)
            npos = jnp.sum(pos)
        fpos = jnp.clip(npos / nmsk, 0.05, 0.95)
        wpos = 1.0 / (2.0 * fpos)
        wneg = 1.0 / (2.0 * (1.0 - fpos))
        scalars = jnp.stack([wpos, wneg]).astype(jnp.float32)
        inputs.append(scalars)
        in_specs.append(pl.BlockSpec(memory_space=pltpu.MemorySpace.SMEM))

    data_spec = pl.BlockSpec(
        (blk_rows, _LANES),
        lambda c, i: (jnp.minimum(c * n_inner + i, n_blocks - 1), 0))

    inputs += [pred_f, targ_f]
    in_specs += [data_spec, data_spec]
    if has_mask:
        inputs.append(mask_f)
        in_specs.append(data_spec)

    kernel = functools.partial(
        _bce_sum_kernel,
        n=n, blk_rows=blk_rows, n_inner=n_inner,
        has_mask=has_mask, rebalance=rebalance, needs_tail=needs_tail)

    out = pl.pallas_call(
        kernel,
        out_shape=jax.ShapeDtypeStruct((num_split, 1, 1), jnp.float32),
        grid=(num_split, n_inner),
        in_specs=in_specs,
        out_specs=pl.BlockSpec((1, 1, 1), lambda c, i: (c, 0, 0)),
        scratch_shapes=[pltpu.VMEM((blk_rows, _LANES), jnp.float32)],
        compiler_params=pltpu.CompilerParams(
            dimension_semantics=("parallel", "arbitrary")),
    )(*inputs)
    return jnp.sum(out)


def _reference_forward(pred, target, mask=None, rebalance=False):
    """Pure-JAX reference mirroring the PyTorch module."""
    loss = (
        jnp.maximum(pred, 0.0)
        - pred * target
        + jnp.log1p(jnp.exp(-jnp.abs(pred)))
    )
    if rebalance:
        if mask is None:
            bmsk = jnp.ones_like(target)
            nmsk = float(np.prod(target.shape))
        else:
            bmsk = (mask > 0.0).astype(jnp.float32)
            nmsk = jnp.sum(bmsk)
        lpos = (target > _THRESH).astype(jnp.float32) * bmsk
        lneg = (target <= _THRESH).astype(jnp.float32) * bmsk
        npos = jnp.sum(lpos)
        fpos = jnp.clip(npos / nmsk, 0.05, 0.95)
        fneg = 1.0 - fpos
        weight = lpos * (1.0 / (2.0 * fpos)) + lneg * (1.0 / (2.0 * fneg))
        loss = loss * weight
    if mask is None:
        return jnp.sum(loss)
    return jnp.sum(loss * mask)


if __name__ == "__main__":
    key = jax.random.PRNGKey(0)

    # Shapes: the small canonical NCHW case, a ragged (non-tile-multiple) case
    # to exercise the in-kernel tail mask, and a multi-block case that
    # exercises the 2-way core split + accumulator pipeline.
    shapes = [(2, 4, 16, 16), (2, 4, 17, 19), (4, 8, 128, 128)]

    for shape in shapes:
        k1, k2, k3, key = jax.random.split(key, 4)
        pred = jax.random.normal(k1, shape, dtype=jnp.float32)
        target = (jax.random.uniform(k2, shape) > 0.7).astype(jnp.float32)
        mask = (jax.random.uniform(k3, shape) > 0.2).astype(jnp.float32)

        for rebalance in (False, True):
            for m in (None, mask):
                got = jax.block_until_ready(
                    binomial_cross_entropy_with_logits(
                        pred, target, mask=m, rebalance=rebalance
                    )
                )
                want = jax.block_until_ready(
                    _reference_forward(pred, target, mask=m, rebalance=rebalance)
                )
                np.testing.assert_allclose(
                    np.asarray(got), np.asarray(want), rtol=1e-4, atol=1e-2
                )

    print("KERNEL_OK")
</pallas_src>

<mosaic_0001>
module attributes {stable_mosaic.version = 11 : i64} {
  func.func @_bce_sum_kernel(%arg0: i32, %arg1: i32, %arg2: memref<16x128xf32, #tpu.memory_space<vmem>>, %arg3: memref<16x128xf32, #tpu.memory_space<vmem>>, %arg4: memref<1x1x1xf32, #tpu.memory_space<vmem>>, %arg5: memref<16x128xf32, #tpu.memory_space<vmem>>) attributes {dimension_semantics = [#tpu.dimension_semantics<parallel>, #tpu.dimension_semantics<arbitrary>], iteration_bounds = array<i64: 1, 1>, scalar_prefetch = 0 : i64, scratch_operands = 1 : i64, tpu.core_type = #tpu.core_type<tc>, window_params = [{transform_indices = @transform_0, window_bounds = array<i64: 16, 128>}, {transform_indices = @transform_1, window_bounds = array<i64: 16, 128>}, {transform_indices = @transform_2, window_bounds = array<i64: 1, 1, 1>}]} {
    %c0_i32 = arith.constant 0 : i32
    %0 = arith.cmpi eq, %arg1, %c0_i32 : i32
    %1 = arith.extui %0 : i1 to i32
    %c0_i32_0 = arith.constant 0 : i32
    %2 = arith.cmpi ne, %1, %c0_i32_0 : i32
    scf.if %2 {
      %cst_11 = arith.constant 0.000000e+00 : f32
      %21 = vector.broadcast %cst_11 : f32 to vector<16x128xf32>
      %c0_12 = arith.constant 0 : index
      %c0_13 = arith.constant 0 : index
      %22 = vector.load %arg5[%c0_12, %c0_13] : memref<16x128xf32, #tpu.memory_space<vmem>>, vector<16x128xf32>
      tpu.vector_store %arg5[%c0_12, %c0_13], %21 {strides = array<i32>} : memref<16x128xf32, #tpu.memory_space<vmem>>, vector<16x128xf32>,
    } else {
    }
    %c0 = arith.constant 0 : index
    %c0_1 = arith.constant 0 : index
    %3 = vector.load %arg2[%c0, %c0_1] : memref<16x128xf32, #tpu.memory_space<vmem>>, vector<16x128xf32>
    %c0_2 = arith.constant 0 : index
    %c0_3 = arith.constant 0 : index
    %4 = vector.load %arg3[%c0_2, %c0_3] : memref<16x128xf32, #tpu.memory_space<vmem>>, vector<16x128xf32>
    %cst = arith.constant 0.000000e+00 : f32
    %5 = vector.broadcast %cst : f32 to vector<16x128xf32>
    %6 = arith.maximumf %3, %5 : vector<16x128xf32>
    %7 = arith.mulf %3, %4 : vector<16x128xf32>
    %8 = arith.subf %6, %7 : vector<16x128xf32>
    %9 = math.absf %3 : vector<16x128xf32>
    %cst_4 = arith.constant 0.000000e+00 : f32
    %10 = vector.broadcast %cst_4 : f32 to vector<16x128xf32>
    %11 = arith.subf %10, %9 : vector<16x128xf32>
    %12 = math.exp %11 : vector<16x128xf32>
    %13 = math.log1p %12 : vector<16x128xf32>
    %14 = arith.addf %8, %13 : vector<16x128xf32>
    %c0_5 = arith.constant 0 : index
    %c0_6 = arith.constant 0 : index
    %15 = vector.load %arg5[%c0_5, %c0_6] : memref<16x128xf32, #tpu.memory_space<vmem>>, vector<16x128xf32>
    %16 = arith.addf %15, %14 : vector<16x128xf32>
    %c0_7 = arith.constant 0 : index
    %c0_8 = arith.constant 0 : index
    %17 = vector.load %arg5[%c0_7, %c0_8] : memref<16x128xf32, #tpu.memory_space<vmem>>, vector<16x128xf32>
    tpu.vector_store %arg5[%c0_7, %c0_8], %16 {strides = array<i32>} : memref<16x128xf32, #tpu.memory_space<vmem>>, vector<16x128xf32>,
    %c0_i32_9 = arith.constant 0 : i32
    %18 = arith.cmpi eq, %arg1, %c0_i32_9 : i32
    %19 = arith.extui %18 : i1 to i32
    %c0_i32_10 = arith.constant 0 : i32
    %20 = arith.cmpi ne, %19, %c0_i32_10 : i32
    scf.if %20 {
      %c0_11 = arith.constant 0 : index
      %c0_12 = arith.constant 0 : index
      %21 = vector.load %arg5[%c0_11, %c0_12] : memref<16x128xf32, #tpu.memory_space<vmem>>, vector<16x128xf32>
      %22 = vector.shape_cast %21 : vector<16x128xf32> to vector<1x16x128xf32>
      %cst_13 = arith.constant dense<0.000000e+00> : vector<1xf32>
      %23 = vector.multi_reduction <add>, %22, %cst_13 [1, 2] : vector<1x16x128xf32> to vector<1xf32>
      %24 = vector.shape_cast %23 : vector<1xf32> to vector<1x1x1xf32>
      %25 = vector.extract %24[0, 0, 0] : f32 from vector<1x1x1xf32>
      %26 = vector.broadcast %25 : f32 to vector<1x1x1xf32>
      %c0_14 = arith.constant 0 : index
      %c0_15 = arith.constant 0 : index
      %c0_16 = arith.constant 0 : index
      %27 = vector.load %arg4[%c0_14, %c0_15, %c0_16] : memref<1x1x1xf32, #tpu.memory_space<vmem>>, vector<1x1x1xf32>
      tpu.vector_store %arg4[%c0_14, %c0_15, %c0_16], %26 {strides = array<i32>} : memref<1x1x1xf32, #tpu.memory_space<vmem>>, vector<1x1x1xf32>,
    } else {
    }
    return
  }
  func.func @transform_0(%arg0: i32, %arg1: i32) -> (i32, i32) {
    %c1_i32 = arith.constant 1 : i32
    %0 = arith.muli %arg0, %c1_i32 : i32
    %1 = arith.addi %0, %arg1 : i32
    %c0_i32 = arith.constant 0 : i32
    %2 = arith.minsi %1, %c0_i32 : i32
    %c0_i32_0 = arith.constant 0 : i32
    %c0_i32_1 = arith.constant 0 : i32
    return %2, %c0_i32_0 : i32, i32
  }
  func.func @transform_1(%arg0: i32, %arg1: i32) -> (i32, i32) {
    %c1_i32 = arith.constant 1 : i32
    %0 = arith.muli %arg0, %c1_i32 : i32
    %1 = arith.addi %0, %arg1 : i32
    %c0_i32 = arith.constant 0 : i32
    %2 = arith.minsi %1, %c0_i32 : i32
    %c0_i32_0 = arith.constant 0 : i32
    %c0_i32_1 = arith.constant 0 : i32
    return %2, %c0_i32_0 : i32, i32
  }
  func.func @transform_2(%arg0: i32, %arg1: i32) -> (i32, i32, i32) {
    %c0_i32 = arith.constant 0 : i32
    %c0_i32_0 = arith.constant 0 : i32
    %c0_i32_1 = arith.constant 0 : i32
    return %arg0, %c0_i32, %c0_i32_0 : i32, i32, i32
  }
}

</mosaic_0001>

<llo_original>
// kernel: tpu_custom_call.1
$region0: #{tpu_custom_call.1}
  #allocation0 [shape = 'u32[]', space=smem, size = 0x4, offset = 0x4, fixed_abs, tag = 'smem constant byte address 0x4 - core index']
  #allocation1 [shape = 'u32[144,128]{1,0:T(1,128)}', space=vmem, size = 0x12000, scoped, tag = 'internal scratch']
  #allocation2 [shape = 'f32[16,128]{1,0:T(8,128)}', space=vmem, size = 0x2000, scoped, tag = 'scratch operand']
  %s0 = inlined_call_operand.hbm [shape: f32[16,128], index: 0, kind: input, shape index: {}]
  %s1 = inlined_call_operand.hbm [shape: f32[16,128], index: 1, kind: input, shape index: {}]
  %s2 = inlined_call_operand.hbm [shape: f32[1,1,1], index: 2, kind: output, shape index: {}]
  %s3 = sld [smem:[#allocation0]]
  $region34: #{tpu_custom_call.1} parent=0
    _
  %s5 = ssub.s32 1, %s3
  %s6 = scalar_select 0, %s5, %s3
  $region1: #{tpu_custom_call.1} parent=0
    #allocation3 [shape = 'u8[8192]{0}', space=vmem, size = 0x2000, scoped, tag = 'input window, operand 0, single buffered']
    #allocation4 [shape = 's32[1]{0}', space=sflag, size = 0x4, scoped, tag = 'scoped memory for tpu_custom_call.1']
    #allocation5 [shape = 's32[1]{0}', space=sflag, size = 0x4, scoped, tag = 'scoped memory for tpu_custom_call.1']
    #allocation6 [shape = 'u8[8192]{0}', space=vmem, size = 0x2000, scoped, tag = 'input window, operand 1, single buffered']
    #allocation7 [shape = 's32[1]{0}', space=sflag, size = 0x4, scoped, tag = 'scoped memory for tpu_custom_call.1']
    #allocation8 [shape = 'u8[512]{0}', space=vmem, size = 0x400, scoped, tag = 'output window, operand 0, single buffered']
    %7 = vsyncpa [#allocation4], 0
    %8 = vsyncpa [#allocation7], 0
    %9 = vsyncpa [#allocation5], 0
    // Predicated region
    $region2: #{tpu_custom_call.1} parent=1 // pred_check
      _
    $region3: #{tpu_custom_call.1} parent=1 // pred_check_branch
      %11 = sbr.rel (0) target = $region5
    $region4: #{tpu_custom_call.1} parent=1 // pred_region
      %s12 = sadd.s32 0, 0
      %p13 = scmp.lt.s32.totalorder %s12, 0
      %s14 = scalar_select %p13, %s12, 0
      %s15 = smul.u32 2, %s14
      %s17 = ssub.s32 256, 256
      %18 = vsyncadd [#allocation4], %s17
      %s19 = smul.addr %s15, 128
      %s20 = scalar_lea.hbm %s0, %s19
      %s21 = sshll.u32 [#allocation3], 4
      %s22 = int_to_ptr.vmem [resolvable:$true] %s21
      %27 = dma.hbm_to_vmem [thread:$0]  %s20, 256, %s22, [#allocation4], 128, 128, 8
    $region5: #{tpu_custom_call.1} parent=1 // pred_fallthru
      _
    // Predicated region
    $region6: #{tpu_custom_call.1} parent=1 // pred_check
      _
    $region7: #{tpu_custom_call.1} parent=1 // pred_check_branch
      %29 = sbr.rel (0) target = $region9
    $region8: #{tpu_custom_call.1} parent=1 // pred_region
      %s30 = sadd.s32 0, 0
      %p31 = scmp.lt.s32.totalorder %s30, 0
      %s32 = scalar_select %p31, %s30, 0
      %s33 = smul.u32 2, %s32
      %s35 = ssub.s32 256, 256
      %36 = vsyncadd [#allocation7], %s35
      %s37 = smul.addr %s33, 128
      %s38 = scalar_lea.hbm %s1, %s37
      %s39 = sshll.u32 [#allocation6], 4
      %s40 = int_to_ptr.vmem [resolvable:$true] %s39
      %45 = dma.hbm_to_vmem [thread:$0]  %s38, 256, %s40, [#allocation7], 128, 128, 8
    $region9: #{tpu_custom_call.1} parent=1 // pred_fallthru
      _
    // Predicated region
    $region10: #{tpu_custom_call.1} parent=1 // pred_check
      _
    $region11: #{tpu_custom_call.1} parent=1 // pred_check_branch
      %47 = sbr.rel (0) target = $region13
    $region12: #{tpu_custom_call.1} parent=1 // pred_region
      %48 = dma.done [#allocation4], 256
    $region13: #{tpu_custom_call.1} parent=1 // pred_fallthru
      _
    // Predicated region
    $region14: #{tpu_custom_call.1} parent=1 // pred_check
      _
    $region15: #{tpu_custom_call.1} parent=1 // pred_check_branch
      %50 = sbr.rel (0) target = $region17
    $region16: #{tpu_custom_call.1} parent=1 // pred_region
      %51 = dma.done [#allocation7], 256
    $region17: #{tpu_custom_call.1} parent=1 // pred_fallthru
      _
    %s52 = sadd.s32 0, 0
    %p53 = scmp.lt.s32.totalorder %s52, 0
    %s54 = scalar_select %p53, %s52, 0
    %s55 = smul.u32 2, %s54
    %s56 = sadd.s32 0, 0
    %p57 = scmp.lt.s32.totalorder %s56, 0
    %s58 = scalar_select %p57, %s56, 0
    %s59 = smul.u32 2, %s58
    %p60 = scmp.eq.s32.totalorder 0, 0
    // Predicated region
    $region18: #{tpu_custom_call.1} parent=1 // pred_check
      %p61 = pneg %p60
    $region19: #{tpu_custom_call.1} parent=1 // pred_check_branch
      %63 = sbr.rel (%p61) target = $region21
    $region20: #{tpu_custom_call.1} parent=1 // pred_region
      %64 = vst [vmem:[#allocation2] sm:$0xff] 0.0
      %65 = vst [vmem:[#allocation2 + $0x8] sm:$0xff] 0.0
    $region21: #{tpu_custom_call.1} parent=1 // pred_fallthru
      _
    %v66 = vld [vmem:[#allocation3] sm:$0xff]
    %v67 = vld [vmem:[#allocation3 + $0x8] sm:$0xff]
    %v68 = vld [vmem:[#allocation6] sm:$0xff]
    %v69 = vld [vmem:[#allocation6 + $0x8] sm:$0xff]
    %v70 = vmax.f32 %v66, 0.0
    %v71 = vmax.f32 %v67, 0.0
    %v72 = vmul.f32 %v66, %v68
    %v73 = vmul.f32 %v67, %v69
    %v74 = vsub.f32 %v70, %v72
    %v75 = vsub.f32 %v71, %v73
    %v76 = vand.u32 2147483647, %v66
    %v77 = vand.u32 2147483647, %v67
    %v78 = vsub.f32 0.0, %v76
    %v79 = vsub.f32 0.0, %v77
    %v80 = vmul.f32 %v78, 1.442695
    %v81 = vpow.pop %v80
    %v82 = vmul.f32 %v79, 1.442695
    %v83 = vpow.pop %v82
    %v84 = vadd.f32 %v81, 1.0
    %v85 = vlog2.pop %v84
    %v86 = vmul.f32 %v85, 0.6931472
    %v87 = vmul.f32 -0.5, %v81
    %v88 = vadd.f32 %v87, 1.0
    %v89 = vmul.f32 %v88, %v81
    %v90 = vand.u32 2147483647, %v81
    %vm91 = vcmp.lt.f32.partialorder %v90, 0.0004427343
    %v92 = vsel %vm91, %v89, %v86
    %v93 = vadd.f32 %v83, 1.0
    %v94 = vlog2.pop %v93
    %v95 = vmul.f32 %v94, 0.6931472
    %v96 = vmul.f32 -0.5, %v83
    %v97 = vadd.f32 %v96, 1.0
    %v98 = vmul.f32 %v97, %v83
    %v99 = vand.u32 2147483647, %v83
    %vm100 = vcmp.lt.f32.partialorder %v99, 0.0004427343
    %v101 = vsel %vm100, %v98, %v95
    %v102 = vadd.f32 %v74, %v92
    %v103 = vadd.f32 %v75, %v101
    %v104 = vld [vmem:[#allocation2] sm:$0xff]
    %v105 = vld [vmem:[#allocation2 + $0x8] sm:$0xff]
    %v106 = vadd.f32 %v104, %v102
    %v107 = vadd.f32 %v105, %v103
    %108 = vst [vmem:[#allocation2] sm:$0xff] %v106
    %109 = vst [vmem:[#allocation2 + $0x8] sm:$0xff] %v107
    // Predicated region
    $region22: #{tpu_custom_call.1} parent=1 // pred_check
      %p110 = pneg %p60
    $region23: #{tpu_custom_call.1} parent=1 // pred_check_branch
      %112 = sbr.rel (%p110) target = $region25
    $region24: #{tpu_custom_call.1} parent=1 // pred_region
      %v113 = vld [vmem:[#allocation2] sm:$0xff]
      %v114 = vld [vmem:[#allocation2 + $0x8] sm:$0xff]
      %v115 = vadd.f32 %v113, %v114
      %116 = vadd.xlane.f32.xlu0 %v115
      %v117 = vpop.xlane.xlu0 %116
      %v118 = vrot.slane %v117, 4
      %v119 = vadd.f32 %v117, %v118
      %v120 = vrot.slane %v119, 2
      %v121 = vadd.f32 %v119, %v120
      %v122 = vrot.slane %v121, 1
      %v123 = vadd.f32 %v121, %v122
      %s124 = vtos %v123
      %v125 = vstv %s124
      %vm126 = vcmask 0
      %127 = vst.msk [vmem:[#allocation8] sm:$0x1] %vm126, %v125
    $region25: #{tpu_custom_call.1} parent=1 // pred_fallthru
      _
    // Predicated region
    $region26: #{tpu_custom_call.1} parent=1 // pred_check
      _
    $region27: #{tpu_custom_call.1} parent=1 // pred_check_branch
      %129 = sbr.rel (0) target = $region29
    $region28: #{tpu_custom_call.1} parent=1 // pred_region
      %s131 = ssub.s32 16, 16
      %132 = vsyncadd [#allocation5], %s131
      %s134 = sshll.u32 [#allocation8], 4
      %s135 = int_to_ptr.vmem [resolvable:$true] %s134
      %137 = dma.vmem_to_hbm [thread:$0]  %s135, 16, %s2, [#allocation5]
    $region29: #{tpu_custom_call.1} parent=1 // pred_fallthru
      _
    // Predicated region
    $region30: #{tpu_custom_call.1} parent=1 // pred_check
      _
    $region31: #{tpu_custom_call.1} parent=1 // pred_check_branch
      %139 = sbr.rel (0) target = $region33
    $region32: #{tpu_custom_call.1} parent=1 // pred_region
      %140 = dma.done [#allocation5], 16
    $region33: #{tpu_custom_call.1} parent=1 // pred_fallthru
      _
    %141 = vsyncpa [#allocation4], 1
    %142 = vsyncpa [#allocation7], 1
    %143 = vsyncpa [#allocation5], 1

</llo_original>
